<compile_context>
chip_gen: v6e
topology: v6e:2x2x1
jax: 0.10.0
libtpu: 0.0.40
codegen_flags: <defaults>
</compile_context>

<pallas_src>
import numpy as np
import jax
import jax.numpy as jnp
from jax.experimental import pallas as pl
from jax.experimental.pallas import tpu as pltpu

_TWO_PI = 2.0 * np.pi
_VMEM_LIMIT = 32 * 1024 * 1024          # raised scoped-VMEM limit (safe on v5e/v6e/v7x)
_OUT_DB_BUDGET = 12 * 1024 * 1024       # bytes for the double-buffered output block


def _pick_tb(rows, width_elems, itemsize, sub):
    """Row-tile size: VMEM-budget driven, sublane-aligned, >=4 grid steps when possible."""
    if rows <= sub:
        return rows                                        # one full-size block
    tb = (_OUT_DB_BUDGET // (2 * width_elems * itemsize)) // sub * sub
    tb = max(sub, tb)
    if rows >= 4 * sub:                                     # keep >=4 steps (v7x megacore)
        tb = min(tb, max(sub, (rows // 4) // sub * sub))
    tb = min(tb, (rows // sub) * sub)                       # never exceed the array
    return max(sub, tb)


def _compiler_params():
    return pltpu.CompilerParams(
        dimension_semantics=("parallel",),
        vmem_limit_bytes=_VMEM_LIMIT,
    )


# --------------------------------------------------------------------------- #
# Path 1: H % 128 == 0 -> lane-aligned half stores, 1 transcendental / element #
# --------------------------------------------------------------------------- #
def _gfp_split(x, W, out_dtype, sub):
    B = x.shape[0]
    H = W.shape[0]
    itemsize = jnp.dtype(out_dtype).itemsize
    tb = _pick_tb(B, 2 * H, itemsize, sub)

    x2d = x.reshape(B, 1)
    w2d = W.reshape(1, H)

    def kernel(x_ref, w_ref, o_ref):
        # theta = (x * W) * 2pi  -- same rounding order as the reference formula.
        theta = x_ref[...] * w_ref[...] * jnp.float32(_TWO_PI)        # (tb, H) f32
        o_ref[:, :H] = jnp.sin(theta).astype(o_ref.dtype)             # lane-aligned
        o_ref[:, H:] = jnp.cos(theta).astype(o_ref.dtype)             # lane-aligned

    return pl.pallas_call(
        kernel,
        out_shape=jax.ShapeDtypeStruct((B, 2 * H), out_dtype),
        grid_spec=pl.GridSpec(
            grid=(pl.cdiv(B, tb),),
            in_specs=[
                pl.BlockSpec((tb, 1), lambda i: (i, 0)),
                pl.BlockSpec((1, H), lambda i: (0, 0)),
            ],
            out_specs=pl.BlockSpec((tb, 2 * H), lambda i: (i, 0)),
        ),
        compiler_params=_compiler_params(),
        cost_estimate=pl.CostEstimate(
            flops=2 * B * H,
            transcendentals=2 * B * H,
            bytes_accessed=4 * (B + H) + 2 * B * H * itemsize,
        ),
    )(x2d, w2d)


# --------------------------------------------------------------------------- #
# Path 2: small / unaligned H -> pack k batch rows per 128-lane output row.    #
# Exact sin/cos (both evaluated, per-lane select) keeps reference numerics.    #
# --------------------------------------------------------------------------- #
def _gfp_select(x, W, k, out_dtype, sub):
    B = x.shape[0]
    H = W.shape[0]
    twoH = 2 * H
    width = k * twoH
    R = B // k
    itemsize = jnp.dtype(out_dtype).itemsize
    tb = _pick_tb(R, width, itemsize, sub)

    x2d = x.reshape(R, k)
    w_row = jnp.tile(jnp.concatenate([W, W]), k).reshape(1, width)
    grp_row = (jnp.arange(width, dtype=jnp.int32) // twoH).reshape(1, width)
    sin_row = ((jnp.arange(width, dtype=jnp.int32) % twoH) < H)
    sin_row = sin_row.astype(jnp.float32).reshape(1, width)

    def kernel(x_ref, w_ref, grp_ref, sel_ref, o_ref):
        grp = grp_ref[...]                                   # (1, width) int32
        # x_rep[r, L] = x_ref[r, L // twoH]  (k small static unroll, pure VPU selects)
        x_rep = x_ref[:, 0:1]
        for j in range(k):
            x_rep = jnp.where(grp == j, x_ref[:, j:j + 1], x_rep)
        theta = x_rep * w_ref[...] * jnp.float32(_TWO_PI)    # (tb, width) f32
        # sin half / cos half selected per lane (2x transcendentals, but lanes are
        # dense and the output store is a single unmasked 128-wide slab).
        val = jnp.where(sel_ref[...] > 0.5, jnp.sin(theta), jnp.cos(theta))
        o_ref[...] = val.astype(o_ref.dtype)

    out = pl.pallas_call(
        kernel,
        out_shape=jax.ShapeDtypeStruct((R, width), out_dtype),
        grid_spec=pl.GridSpec(
            grid=(pl.cdiv(R, tb),),
            in_specs=[
                pl.BlockSpec((tb, k), lambda i: (i, 0)),
                pl.BlockSpec((1, width), lambda i: (0, 0)),
                pl.BlockSpec((1, width), lambda i: (0, 0)),
                pl.BlockSpec((1, width), lambda i: (0, 0)),
            ],
            out_specs=pl.BlockSpec((tb, width), lambda i: (i, 0)),
        ),
        compiler_params=_compiler_params(),
        cost_estimate=pl.CostEstimate(
            flops=3 * B * twoH,
            transcendentals=2 * B * twoH,
            bytes_accessed=4 * B + 12 * width + B * twoH * itemsize,
        ),
    )(x2d, w_row, grp_row, sin_row)
    # Free row-major reshape (no HBM pass): (B//k, k*2H) -> (B, 2H).
    return out.reshape(B, twoH)


def gaussian_fourier_projection(x, W, *, out_dtype=jnp.float32, force_pallas=False):
    """x: (B,) time steps, W: (H,) fixed Gaussian weights (H = embed_dim // 2).

    Returns (B, 2H) = concat([sin(x[:,None]*W*2pi), cos(x[:,None]*W*2pi)], -1),
    matching the PyTorch module. out_dtype=jnp.bfloat16 halves HBM writeback when
    the consumer is bf16; the math is always f32.
    """
    B = x.shape[0]
    H = W.shape[0]
    twoH = 2 * H
    itemsize = jnp.dtype(out_dtype).itemsize

    # Bytes-based fast path: below a few MiB of output, a standalone pallas_call
    # loses to letting XLA fuse sin/cos straight into the consuming MLP.
    if not force_pallas and B * twoH * itemsize < (4 << 20):
        x_proj = (x.astype(jnp.float32)[:, None]
                  * W.astype(jnp.float32)[None, :] * _TWO_PI)
        return jnp.concatenate([jnp.sin(x_proj), jnp.cos(x_proj)],
                               axis=-1).astype(out_dtype)

    xf = x.astype(jnp.float32)
    Wf = W.astype(jnp.float32)
    sub = max(8, 32 // max(1, itemsize))     # 8 rows (f32) / 16 rows (bf16) sublane packing

    if H % 128 == 0:
        return _gfp_split(xf, Wf, out_dtype, sub)

    # Lane-packing factor for small embeddings (2H must divide 128 and B must split evenly).
    k = 1
    if twoH < 128 and 128 % twoH == 0:
        k = 128 // twoH
        if B % k != 0:
            k = 1
    return _gfp_select(xf, Wf, k, out_dtype, sub)


if __name__ == "__main__":
    key = jax.random.PRNGKey(0)
    k_w, k_x, k_w2, k_x2 = jax.random.split(key, 4)

    def ref_fn(xv, Wv):
        x_proj = xv[:, None] * Wv[None, :] * _TWO_PI
        return jnp.concatenate([jnp.sin(x_proj), jnp.cos(x_proj)], axis=-1)

    scale = 30.0

    # 1) Module-like small size: embed_dim=64 -> H=32 -> packed "select" path
    #    (k=2 batch rows per 128-lane output row).
    embed_dim, batch = 64, 8
    W = jax.random.normal(k_w, (embed_dim // 2,), dtype=jnp.float32) * scale
    x = jax.random.uniform(k_x, (batch,), dtype=jnp.float32)
    out = jax.block_until_ready(gaussian_fourier_projection(x, W, force_pallas=True))
    assert out.shape == (batch, embed_dim)
    assert jnp.allclose(out, ref_fn(x, W), atol=1e-5, rtol=1e-5)

    # 2) H % 128 == 0 -> "split" path (aligned half stores), with a batch that is
    #    not a multiple of the row tile to exercise the ragged cdiv grid.
    embed_dim2, batch2 = 256, 300
    W2 = jax.random.normal(k_w2, (embed_dim2 // 2,), dtype=jnp.float32) * scale
    x2 = jax.random.uniform(k_x2, (batch2,), dtype=jnp.float32)
    out2 = jax.block_until_ready(gaussian_fourier_projection(x2, W2, force_pallas=True))
    assert out2.shape == (batch2, embed_dim2)
    # f32 sin/cos at phases up to ~|W|*2pi (a few hundred) can differ from the XLA
    # reference at the phase-ulp level; tolerance reflects that, not the kernel.
    assert jnp.allclose(out2, ref_fn(x2, W2), atol=1e-4, rtol=1e-5)

    print("KERNEL_OK")
</pallas_src>

<mosaic_0001>
module attributes {stable_mosaic.version = 11 : i64} {
  func.func @kernel(%arg0: i32, %arg1: memref<4x2xf32, #tpu.memory_space<vmem>>, %arg2: memref<1x128xf32, #tpu.memory_space<vmem>>, %arg3: memref<1x128xi32, #tpu.memory_space<vmem>>, %arg4: memref<1x128xf32, #tpu.memory_space<vmem>>, %arg5: memref<4x128xf32, #tpu.memory_space<vmem>>) attributes {dimension_semantics = [#tpu.dimension_semantics<parallel>], iteration_bounds = array<i64: 1>, scalar_prefetch = 0 : i64, scratch_operands = 0 : i64, tpu.core_type = #tpu.core_type<tc>, window_params = [{transform_indices = @transform_0, window_bounds = array<i64: 4, 2>}, {pipeline_mode = #tpu.pipeline_mode<synchronous>, transform_indices = @transform_1, window_bounds = array<i64: 1, 128>}, {pipeline_mode = #tpu.pipeline_mode<synchronous>, transform_indices = @transform_2, window_bounds = array<i64: 1, 128>}, {pipeline_mode = #tpu.pipeline_mode<synchronous>, transform_indices = @transform_3, window_bounds = array<i64: 1, 128>}, {transform_indices = @transform_4, window_bounds = array<i64: 4, 128>}]} {
    %c0 = arith.constant 0 : index
    %c0_0 = arith.constant 0 : index
    %0 = vector.load %arg3[%c0, %c0_0] : memref<1x128xi32, #tpu.memory_space<vmem>>, vector<1x128xi32>
    %c0_1 = arith.constant 0 : index
    %c0_2 = arith.constant 0 : index
    %1 = vector.load %arg1[%c0_1, %c0_2] : memref<4x2xf32, #tpu.memory_space<vmem>>, vector<4x1xf32>
    %c0_i32 = arith.constant 0 : i32
    %2 = vector.broadcast %c0_i32 : i32 to vector<1x128xi32>
    %3 = arith.cmpi eq, %0, %2 : vector<1x128xi32>
    %c0_3 = arith.constant 0 : index
    %c0_4 = arith.constant 0 : index
    %4 = vector.load %arg1[%c0_3, %c0_4] : memref<4x2xf32, #tpu.memory_space<vmem>>, vector<4x1xf32>
    %5 = vector.shape_cast %3 : vector<1x128xi1> to vector<1x128xi1>
    %6 = vector.broadcast %5 : vector<1x128xi1> to vector<4x128xi1>
    %7 = vector.shape_cast %4 : vector<4x1xf32> to vector<4x1xf32>
    %8 = vector.broadcast %7 : vector<4x1xf32> to vector<4x128xf32>
    %9 = vector.shape_cast %1 : vector<4x1xf32> to vector<4x1xf32>
    %10 = vector.broadcast %9 : vector<4x1xf32> to vector<4x128xf32>
    %11 = arith.select %6, %8, %10 : vector<4x128xi1>, vector<4x128xf32>
    %c1_i32 = arith.constant 1 : i32
    %12 = vector.broadcast %c1_i32 : i32 to vector<1x128xi32>
    %13 = arith.cmpi eq, %0, %12 : vector<1x128xi32>
    %c0_5 = arith.constant 0 : index
    %c1 = arith.constant 1 : index
    %14 = vector.load %arg1[%c0_5, %c1] : memref<4x2xf32, #tpu.memory_space<vmem>>, vector<4x1xf32>
    %15 = vector.shape_cast %13 : vector<1x128xi1> to vector<1x128xi1>
    %16 = vector.broadcast %15 : vector<1x128xi1> to vector<4x128xi1>
    %17 = vector.shape_cast %14 : vector<4x1xf32> to vector<4x1xf32>
    %18 = vector.broadcast %17 : vector<4x1xf32> to vector<4x128xf32>
    %19 = arith.select %16, %18, %11 : vector<4x128xi1>, vector<4x128xf32>
    %c0_6 = arith.constant 0 : index
    %c0_7 = arith.constant 0 : index
    %20 = vector.load %arg2[%c0_6, %c0_7] : memref<1x128xf32, #tpu.memory_space<vmem>>, vector<1x128xf32>
    %21 = vector.broadcast %20 : vector<1x128xf32> to vector<4x128xf32>
    %22 = arith.mulf %19, %21 : vector<4x128xf32>
    %cst = arith.constant 6.28318548 : f32
    %23 = vector.broadcast %cst : f32 to vector<4x128xf32>
    %24 = arith.mulf %22, %23 : vector<4x128xf32>
    %c0_8 = arith.constant 0 : index
    %c0_9 = arith.constant 0 : index
    %25 = vector.load %arg4[%c0_8, %c0_9] : memref<1x128xf32, #tpu.memory_space<vmem>>, vector<1x128xf32>
    %cst_10 = arith.constant 5.000000e-01 : f32
    %26 = vector.broadcast %cst_10 : f32 to vector<1x128xf32>
    %27 = arith.cmpf ogt, %25, %26 : vector<1x128xf32>
    %28 = math.sin %24 : vector<4x128xf32>
    %29 = math.cos %24 : vector<4x128xf32>
    %30 = vector.shape_cast %27 : vector<1x128xi1> to vector<1x128xi1>
    %31 = vector.broadcast %30 : vector<1x128xi1> to vector<4x128xi1>
    %32 = arith.select %31, %28, %29 : vector<4x128xi1>, vector<4x128xf32>
    %c0_11 = arith.constant 0 : index
    %c0_12 = arith.constant 0 : index
    %33 = vector.load %arg5[%c0_11, %c0_12] : memref<4x128xf32, #tpu.memory_space<vmem>>, vector<4x128xf32>
    tpu.vector_store %arg5[%c0_11, %c0_12], %32 {strides = array<i32>} : memref<4x128xf32, #tpu.memory_space<vmem>>, vector<4x128xf32>,
    return
  }
  func.func @transform_0(%arg0: i32) -> (i32, i32) {
    %c0_i32 = arith.constant 0 : i32
    %c0_i32_0 = arith.constant 0 : i32
    return %arg0, %c0_i32 : i32, i32
  }
  func.func @transform_1(%arg0: i32) -> (i32, i32) {
    %c0_i32 = arith.constant 0 : i32
    %c0_i32_0 = arith.constant 0 : i32
    %c0_i32_1 = arith.constant 0 : i32
    return %c0_i32, %c0_i32_0 : i32, i32
  }
  func.func @transform_2(%arg0: i32) -> (i32, i32) {
    %c0_i32 = arith.constant 0 : i32
    %c0_i32_0 = arith.constant 0 : i32
    %c0_i32_1 = arith.constant 0 : i32
    return %c0_i32, %c0_i32_0 : i32, i32
  }
  func.func @transform_3(%arg0: i32) -> (i32, i32) {
    %c0_i32 = arith.constant 0 : i32
    %c0_i32_0 = arith.constant 0 : i32
    %c0_i32_1 = arith.constant 0 : i32
    return %c0_i32, %c0_i32_0 : i32, i32
  }
  func.func @transform_4(%arg0: i32) -> (i32, i32) {
    %c0_i32 = arith.constant 0 : i32
    %c0_i32_0 = arith.constant 0 : i32
    return %arg0, %c0_i32 : i32, i32
  }
}

</mosaic_0001>

<llo_original>
// kernel: tpu_custom_call.1
$region0: #{tpu_custom_call.1}
  #allocation0 [shape = 'u32[]', space=smem, size = 0x4, offset = 0x4, fixed_abs, tag = 'smem constant byte address 0x4 - core index']
  #allocation1 [shape = 'u32[144,128]{1,0:T(1,128)}', space=vmem, size = 0x12000, scoped, tag = 'internal scratch']
  %s0 = inlined_call_operand.vmem [shape: f32[4,2], index: 0, kind: input, shape index: {}]
  %s1 = inlined_call_operand.vmem [shape: f32[1,128], index: 1, kind: input, shape index: {}]
  %s2 = inlined_call_operand.vmem [shape: s32[1,128], index: 2, kind: input, shape index: {}]
  %s3 = inlined_call_operand.vmem [shape: f32[1,128], index: 3, kind: input, shape index: {}]
  %s4 = inlined_call_operand.hbm [shape: f32[4,128], index: 4, kind: output, shape index: {}]
  %s5 = sld [smem:[#allocation0]]
  $region26: #{tpu_custom_call.1} parent=0
    _
  %s7 = ssub.s32 1, %s5
  %s8 = scalar_select 0, %s7, %s5
  $region1: #{tpu_custom_call.1} parent=0
    #allocation2 [shape = 'u8[2048]{0}', space=vmem, size = 0x800, scoped, tag = 'output window, operand 0, single buffered']
    #allocation3 [shape = 's32[1]{0}', space=sflag, size = 0x4, scoped, tag = 'scoped memory for tpu_custom_call.1']
    %9 = vsyncpa [#allocation3], 0
    // Predicated region
    $region2: #{tpu_custom_call.1} parent=1 // pred_check
      _
    $region3: #{tpu_custom_call.1} parent=1 // pred_check_branch
      %11 = sbr.rel (0) target = $region5
    $region4: #{tpu_custom_call.1} parent=1 // pred_region
      _
    $region5: #{tpu_custom_call.1} parent=1 // pred_fallthru
      _
    // Predicated region
    $region6: #{tpu_custom_call.1} parent=1 // pred_check
      _
    $region7: #{tpu_custom_call.1} parent=1 // pred_check_branch
      %13 = sbr.rel (0) target = $region9
    $region8: #{tpu_custom_call.1} parent=1 // pred_region
      _
    $region9: #{tpu_custom_call.1} parent=1 // pred_fallthru
      _
    // Predicated region
    $region10: #{tpu_custom_call.1} parent=1 // pred_check
      _
    $region11: #{tpu_custom_call.1} parent=1 // pred_check_branch
      %15 = sbr.rel (0) target = $region13
    $region12: #{tpu_custom_call.1} parent=1 // pred_region
      _
    $region13: #{tpu_custom_call.1} parent=1 // pred_fallthru
      _
    // Predicated region
    $region14: #{tpu_custom_call.1} parent=1 // pred_check
      _
    $region15: #{tpu_custom_call.1} parent=1 // pred_check_branch
      %17 = sbr.rel (0) target = $region17
    $region16: #{tpu_custom_call.1} parent=1 // pred_region
      _
    $region17: #{tpu_custom_call.1} parent=1 // pred_fallthru
      _
    %v18 = vld [vmem:[%s2] sm:$0x1]
    %v19 = vld [vmem:[%s0] sm:$0xf]
    %21 = vset.pattern.permute.xlu0 0
    %22 = vperm.xlu0 %21, %v19
    %v23 = vpop.permute.xlu0 %22
    %vm25 = vcmp.eq.s32.totalorder %v18, 1
    %v26 = vsel %vm25, 1, 0
    %v27 = vlaneseq
    %v28 = vshrl.u32 %v27, 7
    %v29 = vsub.s32 0, %v28
    %v30 = vrot.slane %v26, %v29
    %vm31 = vcmp.eq.s32.totalorder %v30, 1
    %32 = vset.pattern.permute.xlu0 1
    %33 = vperm.xlu0 %32, %v19
    %v34 = vpop.permute.xlu0 %33
    %v36 = vsel %vm31, %v34, %v23
    %v37 = vld [vmem:[%s1] sm:$0x1]
    %v39 = vlaneseq
    %v40 = vshrl.u32 %v39, 7
    %v41 = vsub.s32 0, %v40
    %v42 = vrot.slane %v37, %v41
    %v44 = vmul.f32 %v36, %v42
    %v45 = vmul.f32 %v44, 6.2831855
    %v46 = vld [vmem:[%s3] sm:$0x1]
    %vm47 = vcmp.gt.f32.partialorder %v46, 0.5
    %v48 = vand.u32 2147483647, %v45
    %vm49 = vcmp.le.f32.partialorder %v48, 0.7853982
    %vm50 = vcmp.lt.s32.totalorder %v45, 0
    %v51 = vand.u32 %v45, 2139095040
    %v52 = vshrl.u32 %v51, 23
    %v53 = vsub.s32 %v52, 127
    %v54 = vand.u32 2147483647, %v45
    %v55 = vand.u32 %v54, 8388607
    %v56 = vor.u32 %v55, 8388608
    %v57 = vsub.s32 0, %v56
    %v58 = vadd.s32 %v53, 1
    %vm59 = vcmp.gt.s32.totalorder %v58, 0
    %v60 = vsel %vm59, %v58, 0
    %v61 = vshrl.u32 %v60, 5
    %v62 = vand.u32 %v60, 31
    %v63 = vsub.s32 32, %v62
    %v64 = vshrl.u32 683565275, %v63
    %v65 = vshll.u32 683565275, %v62
    %v66 = vshrl.u32 2475754826, %v63
    %v67 = vor.u32 %v65, %v66
    %v68 = vshll.u32 2475754826, %v62
    %v69 = vshrl.u32 2131351028, %v63
    %v70 = vor.u32 %v68, %v69
    %v71 = vshll.u32 2131351028, %v62
    %v72 = vshrl.u32 2102212464, %v63
    %v73 = vor.u32 %v71, %v72
    %v74 = vshll.u32 2102212464, %v62
    %v75 = vshrl.u32 920167782, %v63
    %v76 = vor.u32 %v74, %v75
    %v77 = vshll.u32 920167782, %v62
    %v78 = vshrl.u32 1326507024, %v63
    %v79 = vor.u32 %v77, %v78
    %vm80 = vcmp.lt.s32.totalorder %v61, 1
    %vm81 = vcmp.lt.s32.totalorder %v61, 2
    %vm82 = vcmp.lt.s32.totalorder %v61, 3
    %vm83 = vcmp.lt.s32.totalorder %v61, 4
    %v84 = vsel %vm80, %v64, %v67
    %v85 = vsel %vm83, %v73, 2102212464
    %v86 = vsel %vm82, %v70, %v85
    %v87 = vsel %vm81, %v84, %v86
    %v88 = vsel %vm80, %v67, %v70
    %v89 = vsel %vm83, %v76, 920167782
    %v90 = vsel %vm82, %v73, %v89
    %v91 = vsel %vm81, %v88, %v90
    %v92 = vsel %vm80, %v70, %v73
    %v93 = vsel %vm83, %v79, 1326507024
    %v94 = vsel %vm82, %v76, %v93
    %v95 = vsel %vm81, %v92, %v94
    %v96 = vshll.u32 %v56, 8
    %v97 = vmul.u32.u64.compose %v96, %v95
    %v98 = vextract.low.u32 %v97
    %v99 = vextract.high.u32 %v97
    %v100 = vmul.u32.u64.compose %v96, %v91
    %v101 = vextract.low.u32 %v100
    %v102 = vextract.high.u32 %v100
    %v103 = vmul.u32 %v96, %v87
    %v104 = vadd.s32 %v99, %v101
    %vm105 = vc.u32 %v99, %v101
    %v106 = vadd.s32 %v102, 1
    %v107 = vsel %vm105, %v106, %v102
    %v108 = vadd.s32 %v103, %v107
    %v109 = vadd.s32 %v108, 536870912
    %v110 = vshrl.u32 %v109, 30
    %v111 = vshll.u32 %v110, 30
    %v112 = vsub.s32 %v108, %v111
    %vm113 = vcmp.lt.s32.totalorder %v112, 0
    %v114 = vsub.s32 0, %v112
    %v115 = vsel %vm113, %v114, %v112
    %v116 = vclz %v115
    %v117 = vsub.s32 %v116, 2
    %vm118 = vcmp.gt.s32.totalorder 0, %v117
    %v119 = vsel %vm118, 0, %v117
    %v120 = vsub.s32 32, %v119
    %v121 = vshll.u32 %v112, %v119
    %v122 = vshrl.u32 %v104, %v120
    %v123 = vor.u32 %v121, %v122
    %v124 = vsub.s32 4294967266, %v119
    %v125 = vadd.s32 %v124, 127
    %v126 = vshll.u32 %v125, 23
    %v127 = vor.u32 4788187, %v126
    %v128 = vand.u32 2147483647, %v127
    %v130 = vcvt.s32.f32 %v123
    %v131 = vmul.f32 %v130, %v128
    %v132 = vxor.u32 %v131, 2147483648
    %v133 = vsel %vm50, %v132, %v131
    %v134 = vsub.s32 4, %v110
    %v135 = vsel %vm50, %v134, %v110
    %v136 = vsel %vm49, %v45, %v133
    %v137 = vsel %vm49, 0, %v135
    %v138 = vcosq.f32.pop %v136
    %v139 = vsinq.f32.pop %v136
    %vm140 = vweird.f32 %v45
    %v141 = vadd.s32 %v137, 3
    %v142 = vand.u32 %v141, 3
    %vm143 = vcmp.lt.s32.totalorder %v142, 2
    %vm144 = vcmp.eq.s32.totalorder %v142, 0
    %v145 = vxor.u32 %v139, 2147483648
    %v146 = vsel %vm144, %v138, %v145
    %vm147 = vcmp.eq.s32.totalorder %v142, 2
    %v148 = vxor.u32 %v138, 2147483648
    %v149 = vsel %vm147, %v148, %v139
    %v150 = vsel %vm143, %v146, %v149
    %v151 = vsel %vm140, nan, %v150
    %v152 = vand.u32 2147483647, %v45
    %vm153 = vcmp.le.f32.partialorder %v152, 0.7853982
    %vm154 = vcmp.lt.s32.totalorder %v45, 0
    %v155 = vand.u32 %v45, 2139095040
    %v156 = vshrl.u32 %v155, 23
    %v157 = vsub.s32 %v156, 127
    %v158 = vand.u32 2147483647, %v45
    %v159 = vand.u32 %v158, 8388607
    %v160 = vor.u32 %v159, 8388608
    %v161 = vsub.s32 0, %v160
    %v162 = vadd.s32 %v157, 1
    %vm163 = vcmp.gt.s32.totalorder %v162, 0
    %v164 = vsel %vm163, %v162, 0
    %v165 = vshrl.u32 %v164, 5
    %v166 = vand.u32 %v164, 31
    %v167 = vsub.s32 32, %v166
    %v168 = vshrl.u32 683565275, %v167
    %v169 = vshll.u32 683565275, %v166
    %v170 = vshrl.u32 2475754826, %v167
    %v171 = vor.u32 %v169, %v170
    %v172 = vshll.u32 2475754826, %v166
    %v173 = vshrl.u32 2131351028, %v167
    %v174 = vor.u32 %v172, %v173
    %v175 = vshll.u32 2131351028, %v166
    %v176 = vshrl.u32 2102212464, %v167
    %v177 = vor.u32 %v175, %v176
    %v178 = vshll.u32 2102212464, %v166
    %v179 = vshrl.u32 920167782, %v167
    %v180 = vor.u32 %v178, %v179
    %v181 = vshll.u32 920167782, %v166
    %v182 = vshrl.u32 1326507024, %v167
    %v183 = vor.u32 %v181, %v182
    %vm184 = vcmp.lt.s32.totalorder %v165, 1
    %vm185 = vcmp.lt.s32.totalorder %v165, 2
    %vm186 = vcmp.lt.s32.totalorder %v165, 3
    %vm187 = vcmp.lt.s32.totalorder %v165, 4
    %v188 = vsel %vm184, %v168, %v171
    %v189 = vsel %vm187, %v177, 2102212464
    %v190 = vsel %vm186, %v174, %v189
    %v191 = vsel %vm185, %v188, %v190
    %v192 = vsel %vm184, %v171, %v174
    %v193 = vsel %vm187, %v180, 920167782
    %v194 = vsel %vm186, %v177, %v193
    %v195 = vsel %vm185, %v192, %v194
    %v196 = vsel %vm184, %v174, %v177
    %v197 = vsel %vm187, %v183, 1326507024
    %v198 = vsel %vm186, %v180, %v197
    %v199 = vsel %vm185, %v196, %v198
    %v200 = vshll.u32 %v160, 8
    %v201 = vmul.u32.u64.compose %v200, %v199
    %v202 = vextract.low.u32 %v201
    %v203 = vextract.high.u32 %v201
    %v204 = vmul.u32.u64.compose %v200, %v195
    %v205 = vextract.low.u32 %v204
    %v206 = vextract.high.u32 %v204
    %v207 = vmul.u32 %v200, %v191
    %v208 = vadd.s32 %v203, %v205
    %vm209 = vc.u32 %v203, %v205
    %v210 = vadd.s32 %v206, 1
    %v211 = vsel %vm209, %v210, %v206
    %v212 = vadd.s32 %v207, %v211
    %v213 = vadd.s32 %v212, 536870912
    %v214 = vshrl.u32 %v213, 30
    %v215 = vshll.u32 %v214, 30
    %v216 = vsub.s32 %v212, %v215
    %vm217 = vcmp.lt.s32.totalorder %v216, 0
    %v218 = vsub.s32 0, %v216
    %v219 = vsel %vm217, %v218, %v216
    %v220 = vclz %v219
    %v221 = vsub.s32 %v220, 2
    %vm222 = vcmp.gt.s32.totalorder 0, %v221
    %v223 = vsel %vm222, 0, %v221
    %v224 = vsub.s32 32, %v223
    %v225 = vshll.u32 %v216, %v223
    %v226 = vshrl.u32 %v208, %v224
    %v227 = vor.u32 %v225, %v226
    %v228 = vsub.s32 4294967266, %v223
    %v229 = vadd.s32 %v228, 127
    %v230 = vshll.u32 %v229, 23
    %v231 = vor.u32 4788187, %v230
    %v232 = vand.u32 2147483647, %v231
    %v234 = vcvt.s32.f32 %v227
    %v235 = vmul.f32 %v234, %v232
    %v236 = vxor.u32 %v235, 2147483648
    %v237 = vsel %vm154, %v236, %v235
    %v238 = vsub.s32 4, %v214
    %v239 = vsel %vm154, %v238, %v214
    %v240 = vsel %vm153, %v45, %v237
    %v241 = vsel %vm153, 0, %v239
    %v242 = vcosq.f32.pop %v240
    %v243 = vsinq.f32.pop %v240
    %vm244 = vweird.f32 %v45
    %v245 = vand.u32 %v241, 3
    %vm246 = vcmp.lt.s32.totalorder %v245, 2
    %vm247 = vcmp.eq.s32.totalorder %v245, 0
    %v248 = vxor.u32 %v243, 2147483648
    %v249 = vsel %vm247, %v242, %v248
    %vm250 = vcmp.eq.s32.totalorder %v245, 2
    %v251 = vxor.u32 %v242, 2147483648
    %v252 = vsel %vm250, %v251, %v243
    %v253 = vsel %vm246, %v249, %v252
    %v254 = vsel %vm244, nan, %v253
    %v255 = vsel %vm47, 1, 0
    %v256 = vlaneseq
    %v257 = vshrl.u32 %v256, 7
    %v258 = vsub.s32 0, %v257
    %v259 = vrot.slane %v255, %v258
    %vm260 = vcmp.eq.s32.totalorder %v259, 1
    %v261 = vsel %vm260, %v151, %v254
    %262 = vst [vmem:[#allocation2] sm:$0xf] %v261
    // Predicated region
    $region18: #{tpu_custom_call.1} parent=1 // pred_check
      _
    $region19: #{tpu_custom_call.1} parent=1 // pred_check_branch
      %264 = sbr.rel (0) target = $region21
    $region20: #{tpu_custom_call.1} parent=1 // pred_region
      %s266 = ssub.s32 64, 64
      %267 = vsyncadd [#allocation3], %s266
      %s269 = sshll.u32 [#allocation2], 4
      %s270 = int_to_ptr.vmem [resolvable:$true] %s269
      %272 = dma.vmem_to_hbm [thread:$0]  %s270, 64, %s4, [#allocation3]
    $region21: #{tpu_custom_call.1} parent=1 // pred_fallthru
      _
    // Predicated region
    $region22: #{tpu_custom_call.1} parent=1 // pred_check
      _
    $region23: #{tpu_custom_call.1} parent=1 // pred_check_branch
      %274 = sbr.rel (0) target = $region25
    $region24: #{tpu_custom_call.1} parent=1 // pred_region
      %275 = dma.done [#allocation3], 64
    $region25: #{tpu_custom_call.1} parent=1 // pred_fallthru
      _
    %276 = vsyncpa [#allocation3], 1

</llo_original>
